<compile_context>
chip_gen: v7x
topology: tpu7x:2x2x1
jax: 0.10.0
libtpu: 0.0.40
codegen_flags: <defaults>
</compile_context>

<pallas_src>
import functools

import jax
import jax.numpy as jnp
from jax.experimental import pallas as pl
from jax.experimental.pallas import tpu as pltpu


# ----------------------------------------------------------------------------
# Kernels
# ----------------------------------------------------------------------------
def _layernorm_kernel(x_ref, alpha_ref, bias_ref, o_ref, *, eps, d_model):
    """Row-wise LayerNorm, reduction over the last axis (d_model >= 128 path)."""
    x = x_ref[...].astype(jnp.float32)                     # (block_rows, d_model)
    mean = jnp.mean(x, axis=-1, keepdims=True)             # (block_rows, 1)
    diff = x - mean
    # torch.std default is unbiased (N-1); eps is added to std, not variance.
    # TODO(synk): d_model == 1 is degenerate (torch returns NaN); guarded here.
    bessel = 1.0 / max(d_model - 1, 1)
    var = jnp.sum(diff * diff, axis=-1, keepdims=True) * bessel
    inv = pl.reciprocal(jnp.sqrt(var) + eps, approx=False)  # exact, one per row
    o_ref[...] = ((diff * inv) * alpha_ref[...] + bias_ref[...]).astype(o_ref.dtype)


def _layernorm_folded_kernel(x_ref, alpha_ref, bias_ref, mmean_ref, mvar_ref,
                             o_ref, *, eps):
    """Lane-folded path for d_model < 128.

    Each kernel row packs k = 128 // d_model original rows along the 128-lane
    axis, so HBM loads/stores are lane-dense. The per-segment mean / variance
    are computed with block-diagonal (128, 128) matmuls on the MXU (exact at
    HIGHEST precision); every lane receives its own segment's statistic, so
    everything stays lane-dense with no in-kernel reshapes.
    """
    x = x_ref[...].astype(jnp.float32)                      # (block_rows, 128)
    mean = jnp.dot(x, mmean_ref[...],
                   preferred_element_type=jnp.float32,
                   precision=jax.lax.Precision.HIGHEST)     # segment means, bcast
    diff = x - mean
    var = jnp.dot(diff * diff, mvar_ref[...],
                  preferred_element_type=jnp.float32,
                  precision=jax.lax.Precision.HIGHEST)      # Bessel-corrected var
    inv = pl.reciprocal(jnp.sqrt(var) + eps, approx=False)
    o_ref[...] = ((diff * inv) * alpha_ref[...] + bias_ref[...]).astype(o_ref.dtype)


# ----------------------------------------------------------------------------
# Tiling / VMEM budgeting
# ----------------------------------------------------------------------------
def _vmem_budgets():
    """Generation-aware (data_budget_bytes, vmem_limit_bytes)."""
    try:
        vmem_cap = int(pltpu.get_tpu_info().vmem_capacity_bytes)
    except Exception:
        vmem_cap = 64 * 1024 * 1024  # conservative: assume v7x-class (64 MiB/TC)
    # ~1/3 of VMEM for the double-buffered I/O tiles + f32 intermediates,
    # ~3/4 as the scoped limit (headroom for Mosaic internal scratch).
    data_budget = max(8 * 1024 * 1024, min(40 * 1024 * 1024, vmem_cap // 3))
    vmem_limit = max(32 * 1024 * 1024, min(96 * 1024 * 1024, (vmem_cap * 3) // 4))
    return data_budget, vmem_limit


def _row_alignment(itemsize):
    # Sublane packing: 8 rows for f32, 16 for bf16, 32 for int8/fp8.
    return 8 * max(1, 4 // max(int(itemsize), 1))


def _pick_block_rows(rows, width, itemsize, data_budget):
    row_align = _row_alignment(itemsize)
    # 2 double-buffered input tiles + 2 output tiles, plus ~4 f32 intermediates
    # per resident row (x32, diff, mean/var broadcast, y) inside the kernel.
    bytes_per_row = 4 * width * itemsize + 4 * 4 * width
    total_bytes = rows * width * itemsize

    # Tiny inputs: one (possibly unaligned) full block is cheapest.
    if total_bytes <= 2 * 1024 * 1024 or rows <= 2 * row_align:
        return rows

    br = data_budget // max(bytes_per_row, 1)
    # Keep at least ~4 grid steps so pipelining (and v7x megacore sharding of
    # the "parallel" axis) engages instead of a serialized single block.
    br = min(br, pl.cdiv(rows, 4))
    br = max(row_align, (br // row_align) * row_align)
    return min(br, rows)


# ----------------------------------------------------------------------------
# Wrapper
# ----------------------------------------------------------------------------
def layer_normalization(x, alpha, bias, eps=1e-6, block_rows=None):
    """LayerNormalization forward matching the PyTorch reference.

    x: (..., d_model); alpha, bias: (d_model,)
    """
    orig_shape = x.shape
    d_model = orig_shape[-1]
    rows = 1
    for s in orig_shape[:-1]:
        rows *= s

    itemsize = jnp.dtype(x.dtype).itemsize
    data_budget, vmem_limit = _vmem_budgets()

    # Lane folding: for d_model < 128 (and dividing 128), fold k = 128/d_model
    # rows into the lane axis so loads/stores are full-vreg lane-dense.
    # TODO(synk): general folding for d_model not dividing 128 (e.g. 96) is not
    # implemented; those shapes fall back to the lane-masked path.
    fold_k = 0
    if 1 < d_model < 128 and 128 % d_model == 0:
        k = 128 // d_model
        if rows % k == 0 and rows >= k:
            fold_k = k

    if fold_k:
        width = 128
        rows_eff = rows // fold_k
    else:
        width = d_model
        rows_eff = rows

    x2 = x.reshape(rows_eff, width)

    if block_rows is None:
        block_rows = _pick_block_rows(rows_eff, width, itemsize, data_budget)
    else:
        row_align = _row_alignment(itemsize)
        block_rows = min(int(block_rows), rows_eff)
        if block_rows < rows_eff:
            block_rows = max(row_align, (block_rows // row_align) * row_align)

    num_blocks = pl.cdiv(rows_eff, block_rows)  # tail block padded/masked by Pallas

    compiler_params = pltpu.CompilerParams(
        dimension_semantics=("parallel",),
        vmem_limit_bytes=vmem_limit,
    )

    if fold_k:
        # Parameters tiled across the k folded segments (f32, cast once here).
        alpha_t = jnp.tile(alpha.astype(jnp.float32).reshape(1, d_model), (1, fold_k))
        bias_t = jnp.tile(bias.astype(jnp.float32).reshape(1, d_model), (1, fold_k))
        # Block-diagonal segment-averaging matrices (one 2-pass MXU matmul each).
        seg = jnp.arange(128, dtype=jnp.int32) // d_model
        same = (seg[:, None] == seg[None, :]).astype(jnp.float32)
        m_mean = same / float(d_model)
        m_var = same / float(max(d_model - 1, 1))

        kernel = functools.partial(_layernorm_folded_kernel, eps=eps)
        out = pl.pallas_call(
            kernel,
            out_shape=jax.ShapeDtypeStruct((rows_eff, width), x.dtype),
            grid_spec=pltpu.PrefetchScalarGridSpec(
                num_scalar_prefetch=0,
                grid=(num_blocks,),
                in_specs=[
                    pl.BlockSpec((block_rows, width), lambda i: (i, 0)),
                    pl.BlockSpec((1, width), lambda i: (0, 0)),
                    pl.BlockSpec((1, width), lambda i: (0, 0)),
                    pl.BlockSpec((width, width), lambda i: (0, 0)),
                    pl.BlockSpec((width, width), lambda i: (0, 0)),
                ],
                out_specs=pl.BlockSpec((block_rows, width), lambda i: (i, 0)),
            ),
            compiler_params=compiler_params,
        )(x2, alpha_t, bias_t, m_mean, m_var)
    else:
        alpha2 = alpha.reshape(1, d_model).astype(jnp.float32)
        bias2 = bias.reshape(1, d_model).astype(jnp.float32)

        kernel = functools.partial(_layernorm_kernel, eps=eps, d_model=d_model)
        out = pl.pallas_call(
            kernel,
            out_shape=jax.ShapeDtypeStruct((rows_eff, width), x.dtype),
            grid_spec=pltpu.PrefetchScalarGridSpec(
                num_scalar_prefetch=0,
                grid=(num_blocks,),
                in_specs=[
                    pl.BlockSpec((block_rows, width), lambda i: (i, 0)),
                    pl.BlockSpec((1, width), lambda i: (0, 0)),
                    pl.BlockSpec((1, width), lambda i: (0, 0)),
                ],
                out_specs=pl.BlockSpec((block_rows, width), lambda i: (i, 0)),
            ),
            compiler_params=compiler_params,
        )(x2, alpha2, bias2)

    return out.reshape(orig_shape)


# ----------------------------------------------------------------------------
# Pure-JAX reference (matches the PyTorch module)
# ----------------------------------------------------------------------------
def _reference(x, alpha, bias, eps=1e-6):
    x32 = x.astype(jnp.float32)
    mean = jnp.mean(x32, axis=-1, keepdims=True)
    var = jnp.sum((x32 - mean) ** 2, axis=-1, keepdims=True) / (x.shape[-1] - 1)
    std = jnp.sqrt(var)
    return (alpha * (x32 - mean) / (std + eps) + bias).astype(x.dtype)


if __name__ == "__main__":
    # Small shapes consistent with the module: batch=2, seq=8, d_model=32.
    batch, seq, d_model = 2, 8, 32
    key = jax.random.PRNGKey(0)
    x = jax.random.normal(key, (batch, seq, d_model), dtype=jnp.float32)

    # nn.Parameter(torch.ones/zeros(d_model))
    alpha = jnp.ones((d_model,), dtype=jnp.float32)
    bias = jnp.zeros((d_model,), dtype=jnp.float32)

    out = layer_normalization(x, alpha, bias, eps=1e-6)
    out = jax.block_until_ready(out)

    ref = _reference(x, alpha, bias, eps=1e-6)
    assert out.shape == x.shape
    assert jnp.allclose(out, ref, atol=2e-5, rtol=2e-5), "mismatch (folded d_model<128 case)"

    # Larger, non-divisible row count: exercises the unfolded path + tail block.
    x_big = jax.random.normal(jax.random.PRNGKey(1), (3, 37, 256), dtype=jnp.float32)
    alpha_big = jnp.ones((256,), dtype=jnp.float32)
    bias_big = jnp.zeros((256,), dtype=jnp.float32)
    out_big = jax.block_until_ready(
        layer_normalization(x_big, alpha_big, bias_big, eps=1e-6, block_rows=64))
    ref_big = _reference(x_big, alpha_big, bias_big, eps=1e-6)
    assert jnp.allclose(out_big, ref_big, atol=1e-5, rtol=1e-5), "mismatch (ragged case)"

    print("KERNEL_OK")
</pallas_src>

<mosaic_0001>
module attributes {stable_mosaic.version = 11 : i64} {
  func.func @_layernorm_folded_kernel(%arg0: i32, %arg1: memref<4x128xf32, #tpu.memory_space<vmem>>, %arg2: memref<1x128xf32, #tpu.memory_space<vmem>>, %arg3: memref<1x128xf32, #tpu.memory_space<vmem>>, %arg4: memref<128x128xf32, #tpu.memory_space<vmem>>, %arg5: memref<128x128xf32, #tpu.memory_space<vmem>>, %arg6: memref<4x128xf32, #tpu.memory_space<vmem>>) attributes {dimension_semantics = [#tpu.dimension_semantics<parallel>], iteration_bounds = array<i64: 1>, scalar_prefetch = 0 : i64, scratch_operands = 0 : i64, tpu.core_type = #tpu.core_type<tc>, window_params = [{transform_indices = @transform_0, window_bounds = array<i64: 4, 128>}, {pipeline_mode = #tpu.pipeline_mode<synchronous>, transform_indices = @transform_1, window_bounds = array<i64: 1, 128>}, {pipeline_mode = #tpu.pipeline_mode<synchronous>, transform_indices = @transform_2, window_bounds = array<i64: 1, 128>}, {pipeline_mode = #tpu.pipeline_mode<synchronous>, transform_indices = @transform_3, window_bounds = array<i64: 128, 128>}, {pipeline_mode = #tpu.pipeline_mode<synchronous>, transform_indices = @transform_4, window_bounds = array<i64: 128, 128>}, {transform_indices = @transform_5, window_bounds = array<i64: 4, 128>}]} {
    %c0 = arith.constant 0 : index
    %c0_0 = arith.constant 0 : index
    %0 = vector.load %arg1[%c0, %c0_0] : memref<4x128xf32, #tpu.memory_space<vmem>>, vector<4x128xf32>
    %c0_1 = arith.constant 0 : index
    %c0_2 = arith.constant 0 : index
    %1 = vector.load %arg4[%c0_1, %c0_2] : memref<128x128xf32, #tpu.memory_space<vmem>>, vector<128x128xf32>
    %cst = arith.constant dense<0.000000e+00> : vector<4x128xf32>
    %2 = tpu.matmul %0, %1, %cst {dimension_numbers = #tpu.dot_dimension_numbers<[1], [0], [0], [1], [0, 0, 1, 1], [], []>, precision = #tpu.contract_precision<fp32>} : vector<4x128xf32>, vector<128x128xf32>, vector<4x128xf32> -> vector<4x128xf32>
    %3 = arith.subf %0, %2 : vector<4x128xf32>
    %4 = arith.mulf %3, %3 : vector<4x128xf32>
    %c0_3 = arith.constant 0 : index
    %c0_4 = arith.constant 0 : index
    %5 = vector.load %arg5[%c0_3, %c0_4] : memref<128x128xf32, #tpu.memory_space<vmem>>, vector<128x128xf32>
    %cst_5 = arith.constant dense<0.000000e+00> : vector<4x128xf32>
    %6 = tpu.matmul %4, %5, %cst_5 {dimension_numbers = #tpu.dot_dimension_numbers<[1], [0], [0], [1], [0, 0, 1, 1], [], []>, precision = #tpu.contract_precision<fp32>} : vector<4x128xf32>, vector<128x128xf32>, vector<4x128xf32> -> vector<4x128xf32>
    %7 = math.sqrt %6 : vector<4x128xf32>
    %cst_6 = arith.constant 9.99999997E-7 : f32
    %8 = vector.broadcast %cst_6 : f32 to vector<4x128xf32>
    %9 = arith.addf %7, %8 : vector<4x128xf32>
    %10 = tpu.reciprocal %9 : vector<4x128xf32> -> vector<4x128xf32>
    %11 = arith.mulf %3, %10 : vector<4x128xf32>
    %c0_7 = arith.constant 0 : index
    %c0_8 = arith.constant 0 : index
    %12 = vector.load %arg2[%c0_7, %c0_8] : memref<1x128xf32, #tpu.memory_space<vmem>>, vector<1x128xf32>
    %13 = vector.broadcast %12 : vector<1x128xf32> to vector<4x128xf32>
    %14 = arith.mulf %11, %13 : vector<4x128xf32>
    %c0_9 = arith.constant 0 : index
    %c0_10 = arith.constant 0 : index
    %15 = vector.load %arg3[%c0_9, %c0_10] : memref<1x128xf32, #tpu.memory_space<vmem>>, vector<1x128xf32>
    %16 = vector.broadcast %15 : vector<1x128xf32> to vector<4x128xf32>
    %17 = arith.addf %14, %16 : vector<4x128xf32>
    %c0_11 = arith.constant 0 : index
    %c0_12 = arith.constant 0 : index
    %18 = vector.load %arg6[%c0_11, %c0_12] : memref<4x128xf32, #tpu.memory_space<vmem>>, vector<4x128xf32>
    tpu.vector_store %arg6[%c0_11, %c0_12], %17 {strides = array<i32>} : memref<4x128xf32, #tpu.memory_space<vmem>>, vector<4x128xf32>,
    return
  }
  func.func @transform_0(%arg0: i32) -> (i32, i32) {
    %c0_i32 = arith.constant 0 : i32
    %c0_i32_0 = arith.constant 0 : i32
    return %arg0, %c0_i32 : i32, i32
  }
  func.func @transform_1(%arg0: i32) -> (i32, i32) {
    %c0_i32 = arith.constant 0 : i32
    %c0_i32_0 = arith.constant 0 : i32
    %c0_i32_1 = arith.constant 0 : i32
    return %c0_i32, %c0_i32_0 : i32, i32
  }
  func.func @transform_2(%arg0: i32) -> (i32, i32) {
    %c0_i32 = arith.constant 0 : i32
    %c0_i32_0 = arith.constant 0 : i32
    %c0_i32_1 = arith.constant 0 : i32
    return %c0_i32, %c0_i32_0 : i32, i32
  }
  func.func @transform_3(%arg0: i32) -> (i32, i32) {
    %c0_i32 = arith.constant 0 : i32
    %c0_i32_0 = arith.constant 0 : i32
    %c0_i32_1 = arith.constant 0 : i32
    return %c0_i32, %c0_i32_0 : i32, i32
  }
  func.func @transform_4(%arg0: i32) -> (i32, i32) {
    %c0_i32 = arith.constant 0 : i32
    %c0_i32_0 = arith.constant 0 : i32
    %c0_i32_1 = arith.constant 0 : i32
    return %c0_i32, %c0_i32_0 : i32, i32
  }
  func.func @transform_5(%arg0: i32) -> (i32, i32) {
    %c0_i32 = arith.constant 0 : i32
    %c0_i32_0 = arith.constant 0 : i32
    return %arg0, %c0_i32 : i32, i32
  }
}

</mosaic_0001>

<llo_original>
// kernel: tpu_custom_call.1
$region0: #{tpu_custom_call.1}
  #allocation0 [shape = 'u32[]', space=smem, size = 0x4, offset = 0x4, fixed_abs, tag = 'smem constant byte address 0x4 - core index']
  #allocation1 [shape = 'u32[144,128]{1,0:T(1,128)}', space=vmem, size = 0x12000, scoped, tag = 'internal scratch']
  %s0 = inlined_call_operand.hbm [shape: f32[4,128], index: 0, kind: input, shape index: {}]
  %s1 = inlined_call_operand.vmem [shape: f32[1,128], index: 1, kind: input, shape index: {}]
  %s2 = inlined_call_operand.vmem [shape: f32[1,128], index: 2, kind: input, shape index: {}]
  %s3 = inlined_call_operand.hbm [shape: f32[128,128], index: 3, kind: input, shape index: {}]
  %s4 = inlined_call_operand.hbm [shape: f32[128,128], index: 4, kind: input, shape index: {}]
  %s5 = inlined_call_operand.hbm [shape: f32[4,128], index: 5, kind: output, shape index: {}]
  %s6 = sld [smem:[#allocation0]]
  $region42: #{tpu_custom_call.1} parent=0
    _
  %s8 = ssub.s32 1, %s6
  %s9 = scalar_select 0, %s8, %s6
  $region1: #{tpu_custom_call.1} parent=0
    #allocation2 [shape = 'u8[2048]{0}', space=vmem, size = 0x800, scoped, tag = 'input window, operand 0, single buffered']
    #allocation3 [shape = 's32[1]{0}', space=sflag, size = 0x4, scoped, tag = 'scoped memory for tpu_custom_call.1']
    #allocation4 [shape = 's32[1]{0}', space=sflag, size = 0x4, scoped, tag = 'scoped memory for tpu_custom_call.1']
    #allocation5 [shape = 'u8[65536]{0}', space=vmem, size = 0x10000, scoped, tag = 'input window, operand 3, single buffered']
    #allocation6 [shape = 's32[1]{0}', space=sflag, size = 0x4, scoped, tag = 'scoped memory for tpu_custom_call.1']
    #allocation7 [shape = 'u8[65536]{0}', space=vmem, size = 0x10000, scoped, tag = 'input window, operand 4, single buffered']
    #allocation8 [shape = 'u8[2048]{0}', space=vmem, size = 0x800, scoped, tag = 'output window, operand 0, single buffered']
    %10 = vsyncpa [#allocation3], 0
    %11 = vsyncpa [#allocation6], 0
    %12 = vsyncpa [#allocation4], 0
    // Predicated region
    $region2: #{tpu_custom_call.1} parent=1 // pred_check
      _
    $region3: #{tpu_custom_call.1} parent=1 // pred_check_branch
      %14 = sbr.rel (0) target = $region5
    $region4: #{tpu_custom_call.1} parent=1 // pred_region
      %s16 = ssub.s32 64, 64
      %17 = vsyncadd [#allocation3], %s16
      %s19 = sshll.u32 [#allocation2], 4
      %s20 = int_to_ptr.vmem [resolvable:$true] %s19
      %22 = dma.hbm_to_vmem [thread:$0]  %s0, 64, %s20, [#allocation3]
    $region5: #{tpu_custom_call.1} parent=1 // pred_fallthru
      _
    // Predicated region
    $region6: #{tpu_custom_call.1} parent=1 // pred_check
      _
    $region7: #{tpu_custom_call.1} parent=1 // pred_check_branch
      %24 = sbr.rel (0) target = $region9
    $region8: #{tpu_custom_call.1} parent=1 // pred_region
      _
    $region9: #{tpu_custom_call.1} parent=1 // pred_fallthru
      _
    // Predicated region
    $region10: #{tpu_custom_call.1} parent=1 // pred_check
      _
    $region11: #{tpu_custom_call.1} parent=1 // pred_check_branch
      %26 = sbr.rel (0) target = $region13
    $region12: #{tpu_custom_call.1} parent=1 // pred_region
      _
    $region13: #{tpu_custom_call.1} parent=1 // pred_fallthru
      _
    // Predicated region
    $region14: #{tpu_custom_call.1} parent=1 // pred_check
      _
    $region15: #{tpu_custom_call.1} parent=1 // pred_check_branch
      %28 = sbr.rel (0) target = $region17
    $region16: #{tpu_custom_call.1} parent=1 // pred_region
      %s30 = ssub.s32 2048, 2048
      %31 = vsyncadd [#allocation6], %s30
      %s32 = sshll.u32 [#allocation5], 4
      %s33 = int_to_ptr.vmem [resolvable:$true] %s32
      %38 = dma.hbm_to_vmem [thread:$0]  %s3, 2048, %s33, [#allocation6], 128, 128, 8
    $region17: #{tpu_custom_call.1} parent=1 // pred_fallthru
      _
    // Predicated region
    $region18: #{tpu_custom_call.1} parent=1 // pred_check
      _
    $region19: #{tpu_custom_call.1} parent=1 // pred_check_branch
      %40 = sbr.rel (0) target = $region21
    $region20: #{tpu_custom_call.1} parent=1 // pred_region
      %s42 = ssub.s32 2048, 2048
      %43 = vsyncadd [#allocation6], %s42
      %s44 = sshll.u32 [#allocation7], 4
      %s45 = int_to_ptr.vmem [resolvable:$true] %s44
      %50 = dma.hbm_to_vmem [thread:$0]  %s4, 2048, %s45, [#allocation6], 128, 128, 8
    $region21: #{tpu_custom_call.1} parent=1 // pred_fallthru
      _
    // Predicated region
    $region22: #{tpu_custom_call.1} parent=1 // pred_check
      _
    $region23: #{tpu_custom_call.1} parent=1 // pred_check_branch
      %52 = sbr.rel (0) target = $region25
    $region24: #{tpu_custom_call.1} parent=1 // pred_region
      %53 = dma.done [#allocation3], 64
    $region25: #{tpu_custom_call.1} parent=1 // pred_fallthru
      _
    // Predicated region
    $region26: #{tpu_custom_call.1} parent=1 // pred_check
      _
    $region27: #{tpu_custom_call.1} parent=1 // pred_check_branch
      %55 = sbr.rel (0) target = $region29
    $region28: #{tpu_custom_call.1} parent=1 // pred_region
      %56 = dma.done [#allocation6], 2048
    $region29: #{tpu_custom_call.1} parent=1 // pred_fallthru
      _
    // Predicated region
    $region30: #{tpu_custom_call.1} parent=1 // pred_check
      _
    $region31: #{tpu_custom_call.1} parent=1 // pred_check_branch
      %58 = sbr.rel (0) target = $region33
    $region32: #{tpu_custom_call.1} parent=1 // pred_region
      %59 = dma.done [#allocation6], 2048
    $region33: #{tpu_custom_call.1} parent=1 // pred_fallthru
      _
    %v60 = vld [vmem:[#allocation2] sm:$0xf]
    %v61 = vld [vmem:[#allocation5] sm:$0xff]
    %v62 = vld [vmem:[#allocation5 + $0x8] sm:$0xff]
    %v63 = vld [vmem:[#allocation5 + $0x10] sm:$0xff]
    %v64 = vld [vmem:[#allocation5 + $0x18] sm:$0xff]
    %v65 = vld [vmem:[#allocation5 + $0x20] sm:$0xff]
    %v66 = vld [vmem:[#allocation5 + $0x28] sm:$0xff]
    %v67 = vld [vmem:[#allocation5 + $0x30] sm:$0xff]
    %v68 = vld [vmem:[#allocation5 + $0x38] sm:$0xff]
    %v69 = vld [vmem:[#allocation5 + $0x40] sm:$0xff]
    %v70 = vld [vmem:[#allocation5 + $0x48] sm:$0xff]
    %v71 = vld [vmem:[#allocation5 + $0x50] sm:$0xff]
    %v72 = vld [vmem:[#allocation5 + $0x58] sm:$0xff]
    %v73 = vld [vmem:[#allocation5 + $0x60] sm:$0xff]
    %v74 = vld [vmem:[#allocation5 + $0x68] sm:$0xff]
    %v75 = vld [vmem:[#allocation5 + $0x70] sm:$0xff]
    %v76 = vld [vmem:[#allocation5 + $0x78] sm:$0xff]
    %77 = vmatprep.subr.mxu0 0.0
    %v78 = vand.u32 %v61, 4294901760
    %79 = vmatpush1.msra.mxu0 %v78
    %80 = vmatprep.subr.mxu0 0.0
    %v81 = vand.u32 %v62, 4294901760
    %82 = vmatpush1.msra.mxu0 %v81
    %83 = vmatprep.subr.mxu0 0.0
    %v84 = vand.u32 %v63, 4294901760
    %85 = vmatpush1.msra.mxu0 %v84
    %86 = vmatprep.subr.mxu0 0.0
    %v87 = vand.u32 %v64, 4294901760
    %88 = vmatpush1.msra.mxu0 %v87
    %89 = vmatprep.subr.mxu0 0.0
    %v90 = vand.u32 %v65, 4294901760
    %91 = vmatpush1.msra.mxu0 %v90
    %92 = vmatprep.subr.mxu0 0.0
    %v93 = vand.u32 %v66, 4294901760
    %94 = vmatpush1.msra.mxu0 %v93
    %95 = vmatprep.subr.mxu0 0.0
    %v96 = vand.u32 %v67, 4294901760
    %97 = vmatpush1.msra.mxu0 %v96
    %98 = vmatprep.subr.mxu0 0.0
    %v99 = vand.u32 %v68, 4294901760
    %100 = vmatpush1.msra.mxu0 %v99
    %101 = vmatprep.subr.mxu0 0.0
    %v102 = vand.u32 %v69, 4294901760
    %103 = vmatpush1.msra.mxu0 %v102
    %104 = vmatprep.subr.mxu0 0.0
    %v105 = vand.u32 %v70, 4294901760
    %106 = vmatpush1.msra.mxu0 %v105
    %107 = vmatprep.subr.mxu0 0.0
    %v108 = vand.u32 %v71, 4294901760
    %109 = vmatpush1.msra.mxu0 %v108
    %110 = vmatprep.subr.mxu0 0.0
    %v111 = vand.u32 %v72, 4294901760
    %112 = vmatpush1.msra.mxu0 %v111
    %113 = vmatprep.subr.mxu0 0.0
    %v114 = vand.u32 %v73, 4294901760
    %115 = vmatpush1.msra.mxu0 %v114
    %116 = vmatprep.subr.mxu0 0.0
    %v117 = vand.u32 %v74, 4294901760
    %118 = vmatpush1.msra.mxu0 %v117
    %119 = vmatprep.subr.mxu0 0.0
    %v120 = vand.u32 %v75, 4294901760
    %121 = vmatpush1.msra.mxu0 %v120
    %122 = vmatprep.subr.mxu0 0.0
    %v123 = vand.u32 %v76, 4294901760
    %124 = vmatpush1.msra.mxu0 %v123
    %125 = vmatprep.subr.mxu0 0.0
    %126 = vmatpush1.msra.mxu0 0.0
    %127 = vmatprep.subr.mxu0 0.0
    %128 = vmatpush1.msra.mxu0 0.0
    %129 = vmatprep.subr.mxu0 0.0
    %130 = vmatpush1.msra.mxu0 0.0
    %131 = vmatprep.subr.mxu0 0.0
    %132 = vmatpush1.msra.mxu0 0.0
    %133 = vmatprep.subr.mxu0 0.0
    %134 = vmatpush1.msra.mxu0 0.0
    %135 = vmatprep.subr.mxu0 0.0
    %136 = vmatpush1.msra.mxu0 0.0
    %137 = vmatprep.subr.mxu0 0.0
    %138 = vmatpush1.msra.mxu0 0.0
    %139 = vmatprep.subr.mxu0 0.0
    %140 = vmatpush1.msra.mxu0 0.0
    %141 = vmatprep.subr.mxu0 0.0
    %142 = vmatpush1.msra.mxu0 0.0
    %143 = vmatprep.subr.mxu0 0.0
    %144 = vmatpush1.msra.mxu0 0.0
    %145 = vmatprep.subr.mxu0 0.0
    %146 = vmatpush1.msra.mxu0 0.0
    %147 = vmatprep.subr.mxu0 0.0
    %148 = vmatpush1.msra.mxu0 0.0
    %149 = vmatprep.subr.mxu0 0.0
    %150 = vmatpush1.msra.mxu0 0.0
    %151 = vmatprep.subr.mxu0 0.0
    %152 = vmatpush1.msra.mxu0 0.0
    %153 = vmatprep.subr.mxu0 0.0
    %154 = vmatpush1.msra.mxu0 0.0
    %155 = vmatprep.subr.mxu0 0.0
    %156 = vmatpush1.msra.mxu0 0.0
    %157 = vmatprep.mubr.f32.mxu0 0.0
    %v158 = vand.u32 %v60, 4294901760
    %v159 = vsub.f32 %v60, %v158
    %v160 = vand.u32 %v159, 4294901760
    %v161 = vsub.f32 %v159, %v160
    %v162 = vand.u32 %v161, 4294901760
    %163 = vmatmul.mubr.f32.gmra.mrb[0].mxu0 %v162
    %v164 = vpop.f32.mrb[0].mxu0
    %v165 = vadd.f32 0.0, %v164
    %v166 = vpop.f32.mrb[0].mxu0
    %167 = vdwg.mxu0
    %168 = vmatprep.subr.mxu0 0.0
    %v169 = vand.u32 %v61, 4294901760
    %v170 = vsub.f32 %v61, %v169
    %v171 = vand.u32 %v170, 4294901760
    %v172 = vsub.f32 %v170, %v171
    %v173 = vand.u32 %v172, 4294901760
    %174 = vmatpush1.msra.mxu0 %v173
    %175 = vmatprep.subr.mxu0 0.0
    %v176 = vand.u32 %v62, 4294901760
    %v177 = vsub.f32 %v62, %v176
    %v178 = vand.u32 %v177, 4294901760
    %v179 = vsub.f32 %v177, %v178
    %v180 = vand.u32 %v179, 4294901760
    %181 = vmatpush1.msra.mxu0 %v180
    %182 = vmatprep.subr.mxu0 0.0
    %v183 = vand.u32 %v63, 4294901760
    %v184 = vsub.f32 %v63, %v183
    %v185 = vand.u32 %v184, 4294901760
    %v186 = vsub.f32 %v184, %v185
    %v187 = vand.u32 %v186, 4294901760
    %188 = vmatpush1.msra.mxu0 %v187
    %189 = vmatprep.subr.mxu0 0.0
    %v190 = vand.u32 %v64, 4294901760
    %v191 = vsub.f32 %v64, %v190
    %v192 = vand.u32 %v191, 4294901760
    %v193 = vsub.f32 %v191, %v192
    %v194 = vand.u32 %v193, 4294901760
    %195 = vmatpush1.msra.mxu0 %v194
    %196 = vmatprep.subr.mxu0 0.0
    %v197 = vand.u32 %v65, 4294901760
    %v198 = vsub.f32 %v65, %v197
    %v199 = vand.u32 %v198, 4294901760
    %v200 = vsub.f32 %v198, %v199
    %v201 = vand.u32 %v200, 4294901760
    %202 = vmatpush1.msra.mxu0 %v201
    %203 = vmatprep.subr.mxu0 0.0
    %v204 = vand.u32 %v66, 4294901760
    %v205 = vsub.f32 %v66, %v204
    %v206 = vand.u32 %v205, 4294901760
    %v207 = vsub.f32 %v205, %v206
    %v208 = vand.u32 %v207, 4294901760
    %209 = vmatpush1.msra.mxu0 %v208
    %210 = vmatprep.subr.mxu0 0.0
    %v211 = vand.u32 %v67, 4294901760
    %v212 = vsub.f32 %v67, %v211
    %v213 = vand.u32 %v212, 4294901760
    %v214 = vsub.f32 %v212, %v213
    %v215 = vand.u32 %v214, 4294901760
    %216 = vmatpush1.msra.mxu0 %v215
    %217 = vmatprep.subr.mxu0 0.0
    %v218 = vand.u32 %v68, 4294901760
    %v219 = vsub.f32 %v68, %v218
    %v220 = vand.u32 %v219, 4294901760
    %v221 = vsub.f32 %v219, %v220
    %v222 = vand.u32 %v221, 4294901760
    %223 = vmatpush1.msra.mxu0 %v222
    %224 = vmatprep.subr.mxu0 0.0
    %v225 = vand.u32 %v69, 4294901760
    %v226 = vsub.f32 %v69, %v225
    %v227 = vand.u32 %v226, 4294901760
    %v228 = vsub.f32 %v226, %v227
    %v229 = vand.u32 %v228, 4294901760
    %230 = vmatpush1.msra.mxu0 %v229
    %231 = vmatprep.subr.mxu0 0.0
    %v232 = vand.u32 %v70, 4294901760
    %v233 = vsub.f32 %v70, %v232
    %v234 = vand.u32 %v233, 4294901760
    %v235 = vsub.f32 %v233, %v234
    %v236 = vand.u32 %v235, 4294901760
    %237 = vmatpush1.msra.mxu0 %v236
    %238 = vmatprep.subr.mxu0 0.0
    %v239 = vand.u32 %v71, 4294901760
    %v240 = vsub.f32 %v71, %v239
    %v241 = vand.u32 %v240, 4294901760
    %v242 = vsub.f32 %v240, %v241
    %v243 = vand.u32 %v242, 4294901760
    %244 = vmatpush1.msra.mxu0 %v243
    %245 = vmatprep.subr.mxu0 0.0
    %v246 = vand.u32 %v72, 4294901760
    %v247 = vsub.f32 %v72, %v246
    %v248 = vand.u32 %v247, 4294901760
    %v249 = vsub.f32 %v247, %v248
    %v250 = vand.u32 %v249, 4294901760
    %251 = vmatpush1.msra.mxu0 %v250
    %252 = vmatprep.subr.mxu0 0.0
    %v253 = vand.u32 %v73, 4294901760
    %v254 = vsub.f32 %v73, %v253
    %v255 = vand.u32 %v254, 4294901760
    %v256 = vsub.f32 %v254, %v255
    %v257 = vand.u32 %v256, 4294901760
    %258 = vmatpush1.msra.mxu0 %v257
    %259 = vmatprep.subr.mxu0 0.0
    %v260 = vand.u32 %v74, 4294901760
    %v261 = vsub.f32 %v74, %v260
    %v262 = vand.u32 %v261, 4294901760
    %v263 = vsub.f32 %v261, %v262
    %v264 = vand.u32 %v263, 4294901760
    %265 = vmatpush1.msra.mxu0 %v264
    %266 = vmatprep.subr.mxu0 0.0
    %v267 = vand.u32 %v75, 4294901760
    %v268 = vsub.f32 %v75, %v267
    %v269 = vand.u32 %v268, 4294901760
    %v270 = vsub.f32 %v268, %v269
    %v271 = vand.u32 %v270, 4294901760
    %272 = vmatpush1.msra.mxu0 %v271
    %273 = vmatprep.subr.mxu0 0.0
    %v274 = vand.u32 %v76, 4294901760
    %v275 = vsub.f32 %v76, %v274
    %v276 = vand.u32 %v275, 4294901760
    %v277 = vsub.f32 %v275, %v276
    %v278 = vand.u32 %v277, 4294901760
    %279 = vmatpush1.msra.mxu0 %v278
    %280 = vmatprep.subr.mxu0 0.0
    %281 = vmatpush1.msra.mxu0 0.0
    %282 = vmatprep.subr.mxu0 0.0
    %283 = vmatpush1.msra.mxu0 0.0
    %284 = vmatprep.subr.mxu0 0.0
    %285 = vmatpush1.msra.mxu0 0.0
    %286 = vmatprep.subr.mxu0 0.0
    %287 = vmatpush1.msra.mxu0 0.0
    %288 = vmatprep.subr.mxu0 0.0
    %289 = vmatpush1.msra.mxu0 0.0
    %290 = vmatprep.subr.mxu0 0.0
    %291 = vmatpush1.msra.mxu0 0.0
    %292 = vmatprep.subr.mxu0 0.0
    %293 = vmatpush1.msra.mxu0 0.0
    %294 = vmatprep.subr.mxu0 0.0
    %295 = vmatpush1.msra.mxu0 0.0
    %296 = vmatprep.subr.mxu0 0.0
    %297 = vmatpush1.msra.mxu0 0.0
    %298 = vmatprep.subr.mxu0 0.0
    %299 = vmatpush1.msra.mxu0 0.0
    %300 = vmatprep.subr.mxu0 0.0
    %301 = vmatpush1.msra.mxu0 0.0
    %302 = vmatprep.subr.mxu0 0.0
    %303 = vmatpush1.msra.mxu0 0.0
    %304 = vmatprep.subr.mxu0 0.0
    %305 = vmatpush1.msra.mxu0 0.0
    %306 = vmatprep.subr.mxu0 0.0
    %307 = vmatpush1.msra.mxu0 0.0
    %308 = vmatprep.subr.mxu0 0.0
    %309 = vmatpush1.msra.mxu0 0.0
    %310 = vmatprep.subr.mxu0 0.0
    %311 = vmatpush1.msra.mxu0 0.0
    %312 = vmatprep.mubr.f32.mxu0 0.0
    %v313 = vand.u32 %v60, 4294901760
    %314 = vmatmul.mubr.f32.gmra.mrb[0].mxu0 %v313
    %v315 = vpop.f32.mrb[0].mxu0
    %v316 = vadd.f32 %v165, %v315
    %v317 = vpop.f32.mrb[0].mxu0
    %318 = vdwg.mxu0
    %319 = vmatprep.subr.mxu0 0.0
    %v320 = vand.u32 %v61, 4294901760
    %v321 = vsub.f32 %v61, %v320
    %322 = vmatpush1.msra.mxu0 %v321
    %323 = vmatprep.subr.mxu0 0.0
    %v324 = vand.u32 %v62, 4294901760
    %v325 = vsub.f32 %v62, %v324
    %326 = vmatpush1.msra.mxu0 %v325
    %327 = vmatprep.subr.mxu0 0.0
    %v328 = vand.u32 %v63, 4294901760
    %v329 = vsub.f32 %v63, %v328
    %330 = vmatpush1.msra.mxu0 %v329
    %331 = vmatprep.subr.mxu0 0.0
    %v332 = vand.u32 %v64, 4294901760
    %v333 = vsub.f32 %v64, %v332
    %334 = vmatpush1.msra.mxu0 %v333
    %335 = vmatprep.subr.mxu0 0.0
    %v336 = vand.u32 %v65, 4294901760
    %v337 = vsub.f32 %v65, %v336
    %338 = vmatpush1.msra.mxu0 %v337
    %339 = vmatprep.subr.mxu0 0.0
    %v340 = vand.u32 %v66, 4294901760
    %v341 = vsub.f32 %v66, %v340
    %342 = vmatpush1.msra.mxu0 %v341
    %343 = vmatprep.subr.mxu0 0.0
    %v344 = vand.u32 %v67, 4294901760
    %v345 = vsub.f32 %v67, %v344
    %346 = vmatpush1.msra.mxu0 %v345
    %347 = vmatprep.subr.mxu0 0.0
    %v348 = vand.u32 %v68, 4294901760
    %v349 = vsub.f32 %v68, %v348
    %350 = vmatpush1.msra.mxu0 %v349
    %351 = vmatprep.subr.mxu0 0.0
    %v352 = vand.u32 %v69, 4294901760
    %v353 = vsub.f32 %v69, %v352
    %354 = vmatpush1.msra.mxu0 %v353
    %355 = vmatprep.subr.mxu0 0.0
    %v356 = vand.u32 %v70, 4294901760
    %v357 = vsub.f32 %v70, %v356
    %358 = vmatpush1.msra.mxu0 %v357
    %359 = vmatprep.subr.mxu0 0.0
    %v360 = vand.u32 %v71, 4294901760
    %v361 = vsub.f32 %v71, %v360
    %362 = vmatpush1.msra.mxu0 %v361
    %363 = vmatprep.subr.mxu0 0.0
    %v364 = vand.u32 %v72, 4294901760
    %v365 = vsub.f32 %v72, %v364
    %366 = vmatpush1.msra.mxu0 %v365
    %367 = vmatprep.subr.mxu0 0.0
    %v368 = vand.u32 %v73, 4294901760
    %v369 = vsub.f32 %v73, %v368
    %370 = vmatpush1.msra.mxu0 %v369
    %371 = vmatprep.subr.mxu0 0.0
    %v372 = vand.u32 %v74, 4294901760
    %v373 = vsub.f32 %v74, %v372
    %374 = vmatpush1.msra.mxu0 %v373
    %375 = vmatprep.subr.mxu0 0.0
    %v376 = vand.u32 %v75, 4294901760
    %v377 = vsub.f32 %v75, %v376
    %378 = vmatpush1.msra.mxu0 %v377
    %379 = vmatprep.subr.mxu0 0.0
    %v380 = vand.u32 %v76, 4294901760
    %v381 = vsub.f32 %v76, %v380
    %382 = vmatpush1.msra.mxu0 %v381
    %383 = vmatprep.subr.mxu0 0.0
    %384 = vmatpush1.msra.mxu0 0.0
    %385 = vmatprep.subr.mxu0 0.0
    %386 = vmatpush1.msra.mxu0 0.0
    %387 = vmatprep.subr.mxu0 0.0
    %388 = vmatpush1.msra.mxu0 0.0
    %389 = vmatprep.subr.mxu0 0.0
    %390 = vmatpush1.msra.mxu0 0.0
    %391 = vmatprep.subr.mxu0 0.0
    %392 = vmatpush1.msra.mxu0 0.0
    %393 = vmatprep.subr.mxu0 0.0
    %394 = vmatpush1.msra.mxu0 0.0
    %395 = vmatprep.subr.mxu0 0.0
    %396 = vmatpush1.msra.mxu0 0.0
    %397 = vmatprep.subr.mxu0 0.0
    %398 = vmatpush1.msra.mxu0 0.0
    %399 = vmatprep.subr.mxu0 0.0
    %400 = vmatpush1.msra.mxu0 0.0
    %401 = vmatprep.subr.mxu0 0.0
    %402 = vmatpush1.msra.mxu0 0.0
    %403 = vmatprep.subr.mxu0 0.0
    %404 = vmatpush1.msra.mxu0 0.0
    %405 = vmatprep.subr.mxu0 0.0
    %406 = vmatpush1.msra.mxu0 0.0
    %407 = vmatprep.subr.mxu0 0.0
    %408 = vmatpush1.msra.mxu0 0.0
    %409 = vmatprep.subr.mxu0 0.0
    %410 = vmatpush1.msra.mxu0 0.0
    %411 = vmatprep.subr.mxu0 0.0
    %412 = vmatpush1.msra.mxu0 0.0
    %413 = vmatprep.subr.mxu0 0.0
    %414 = vmatpush1.msra.mxu0 0.0
    %415 = vmatprep.mubr.f32.mxu0 0.0
    %v416 = vand.u32 %v60, 4294901760
    %v417 = vsub.f32 %v60, %v416
    %418 = vmatmul.mubr.f32.gmra.mrb[0].mxu0 %v417
    %v419 = vpop.f32.mrb[0].mxu0
    %v420 = vadd.f32 %v316, %v419
    %v421 = vpop.f32.mrb[0].mxu0
    %422 = vdwg.mxu0
    %423 = vmatprep.subr.mxu0 0.0
    %v424 = vand.u32 %v61, 4294901760
    %425 = vmatpush1.msra.mxu0 %v424
    %426 = vmatprep.subr.mxu0 0.0
    %v427 = vand.u32 %v62, 4294901760
    %428 = vmatpush1.msra.mxu0 %v427
    %429 = vmatprep.subr.mxu0 0.0
    %v430 = vand.u32 %v63, 4294901760
    %431 = vmatpush1.msra.mxu0 %v430
    %432 = vmatprep.subr.mxu0 0.0
    %v433 = vand.u32 %v64, 4294901760
    %434 = vmatpush1.msra.mxu0 %v433
    %435 = vmatprep.subr.mxu0 0.0
    %v436 = vand.u32 %v65, 4294901760
    %437 = vmatpush1.msra.mxu0 %v436
    %438 = vmatprep.subr.mxu0 0.0
    %v439 = vand.u32 %v66, 4294901760
    %440 = vmatpush1.msra.mxu0 %v439
    %441 = vmatprep.subr.mxu0 0.0
    %v442 = vand.u32 %v67, 4294901760
    %443 = vmatpush1.msra.mxu0 %v442
    %444 = vmatprep.subr.mxu0 0.0
    %v445 = vand.u32 %v68, 4294901760
    %446 = vmatpush1.msra.mxu0 %v445
    %447 = vmatprep.subr.mxu0 0.0
    %v448 = vand.u32 %v69, 4294901760
    %449 = vmatpush1.msra.mxu0 %v448
    %450 = vmatprep.subr.mxu0 0.0
    %v451 = vand.u32 %v70, 4294901760
    %452 = vmatpush1.msra.mxu0 %v451
    %453 = vmatprep.subr.mxu0 0.0
    %v454 = vand.u32 %v71, 4294901760
    %455 = vmatpush1.msra.mxu0 %v454
    %456 = vmatprep.subr.mxu0 0.0
    %v457 = vand.u32 %v72, 4294901760
    %458 = vmatpush1.msra.mxu0 %v457
    %459 = vmatprep.subr.mxu0 0.0
    %v460 = vand.u32 %v73, 4294901760
    %461 = vmatpush1.msra.mxu0 %v460
    %462 = vmatprep.subr.mxu0 0.0
    %v463 = vand.u32 %v74, 4294901760
    %464 = vmatpush1.msra.mxu0 %v463
    %465 = vmatprep.subr.mxu0 0.0
    %v466 = vand.u32 %v75, 4294901760
    %467 = vmatpush1.msra.mxu0 %v466
    %468 = vmatprep.subr.mxu0 0.0
    %v469 = vand.u32 %v76, 4294901760
    %470 = vmatpush1.msra.mxu0 %v469
    %471 = vmatprep.subr.mxu0 0.0
    %472 = vmatpush1.msra.mxu0 0.0
    %473 = vmatprep.subr.mxu0 0.0
    %474 = vmatpush1.msra.mxu0 0.0
    %475 = vmatprep.subr.mxu0 0.0
    %476 = vmatpush1.msra.mxu0 0.0
    %477 = vmatprep.subr.mxu0 0.0
    %478 = vmatpush1.msra.mxu0 0.0
    %479 = vmatprep.subr.mxu0 0.0
    %480 = vmatpush1.msra.mxu0 0.0
    %481 = vmatprep.subr.mxu0 0.0
    %482 = vmatpush1.msra.mxu0 0.0
    %483 = vmatprep.subr.mxu0 0.0
    %484 = vmatpush1.msra.mxu0 0.0
    %485 = vmatprep.subr.mxu0 0.0
    %486 = vmatpush1.msra.mxu0 0.0
    %487 = vmatprep.subr.mxu0 0.0
    %488 = vmatpush1.msra.mxu0 0.0
    %489 = vmatprep.subr.mxu0 0.0
    %490 = vmatpush1.msra.mxu0 0.0
    %491 = vmatprep.subr.mxu0 0.0
    %492 = vmatpush1.msra.mxu0 0.0
    %493 = vmatprep.subr.mxu0 0.0
    %494 = vmatpush1.msra.mxu0 0.0
    %495 = vmatprep.subr.mxu0 0.0
    %496 = vmatpush1.msra.mxu0 0.0
    %497 = vmatprep.subr.mxu0 0.0
    %498 = vmatpush1.msra.mxu0 0.0
    %499 = vmatprep.subr.mxu0 0.0
    %500 = vmatpush1.msra.mxu0 0.0
    %501 = vmatprep.subr.mxu0 0.0
    %502 = vmatpush1.msra.mxu0 0.0
    %503 = vmatprep.mubr.f32.mxu0 0.0
    %v504 = vand.u32 %v60, 4294901760
    %v505 = vsub.f32 %v60, %v504
    %v506 = vand.u32 %v505, 4294901760
    %507 = vmatmul.mubr.f32.gmra.mrb[0].mxu0 %v506
    %v508 = vpop.f32.mrb[0].mxu0
    %v509 = vadd.f32 %v420, %v508
    %v510 = vpop.f32.mrb[0].mxu0
    %511 = vdwg.mxu0
    %512 = vmatprep.subr.mxu0 0.0
    %v513 = vand.u32 %v61, 4294901760
    %v514 = vsub.f32 %v61, %v513
    %v515 = vand.u32 %v514, 4294901760
    %516 = vmatpush1.msra.mxu0 %v515
    %517 = vmatprep.subr.mxu0 0.0
    %v518 = vand.u32 %v62, 4294901760
    %v519 = vsub.f32 %v62, %v518
    %v520 = vand.u32 %v519, 4294901760
    %521 = vmatpush1.msra.mxu0 %v520
    %522 = vmatprep.subr.mxu0 0.0
    %v523 = vand.u32 %v63, 4294901760
    %v524 = vsub.f32 %v63, %v523
    %v525 = vand.u32 %v524, 4294901760
    %526 = vmatpush1.msra.mxu0 %v525
    %527 = vmatprep.subr.mxu0 0.0
    %v528 = vand.u32 %v64, 4294901760
    %v529 = vsub.f32 %v64, %v528
    %v530 = vand.u32 %v529, 4294901760
    %531 = vmatpush1.msra.mxu0 %v530
    %532 = vmatprep.subr.mxu0 0.0
    %v533 = vand.u32 %v65, 4294901760
    %v534 = vsub.f32 %v65, %v533
    %v535 = vand.u32 %v534, 4294901760
    %536 = vmatpush1.msra.mxu0 %v535
    %537 = vmatprep.subr.mxu0 0.0
    %v538 = vand.u32 %v66, 4294901760
    %v539 = vsub.f32 %v66, %v538
    %v540 = vand.u32 %v539, 4294901760
    %541 = vmatpush1.msra.mxu0 %v540
    %542 = vmatprep.subr.mxu0 0.0
    %v543 = vand.u32 %v67, 4294901760
    %v544 = vsub.f32 %v67, %v543
    %v545 = vand.u32 %v544, 4294901760
    %546 = vmatpush1.msra.mxu0 %v545
    %547 = vmatprep.subr.mxu0 0.0
    %v548 = vand.u32 %v68, 4294901760
    %v549 = vsub.f32 %v68, %v548
    %v550 = vand.u32 %v549, 4294901760
    %551 = vmatpush1.msra.mxu0 %v550
    %552 = vmatprep.subr.mxu0 0.0
    %v553 = vand.u32 %v69, 4294901760
    %v554 = vsub.f32 %v69, %v553
    %v555 = vand.u32 %v554, 4294901760
    %556 = vmatpush1.msra.mxu0 %v555
    %557 = vmatprep.subr.mxu0 0.0
    %v558 = vand.u32 %v70, 4294901760
    %v559 = vsub.f32 %v70, %v558
    %v560 = vand.u32 %v559, 4294901760
    %561 = vmatpush1.msra.mxu0 %v560
    %562 = vmatprep.subr.mxu0 0.0
    %v563 = vand.u32 %v71, 4294901760
    %v564 = vsub.f32 %v71, %v563
    %v565 = vand.u32 %v564, 4294901760
    %566 = vmatpush1.msra.mxu0 %v565
    %567 = vmatprep.subr.mxu0 0.0
    %v568 = vand.u32 %v72, 4294901760
    %v569 = vsub.f32 %v72, %v568
    %v570 = vand.u32 %v569, 4294901760
    %571 = vmatpush1.msra.mxu0 %v570
    %572 = vmatprep.subr.mxu0 0.0
    %v573 = vand.u32 %v73, 4294901760
    %v574 = vsub.f32 %v73, %v573
    %v575 = vand.u32 %v574, 4294901760
    %576 = vmatpush1.msra.mxu0 %v575
    %577 = vmatprep.subr.mxu0 0.0
    %v578 = vand.u32 %v74, 4294901760
    %v579 = vsub.f32 %v74, %v578
    %v580 = vand.u32 %v579, 4294901760
    %581 = vmatpush1.msra.mxu0 %v580
    %582 = vmatprep.subr.mxu0 0.0
    %v583 = vand.u32 %v75, 4294901760
    %v584 = vsub.f32 %v75, %v583
    %v585 = vand.u32 %v584, 4294901760
    %586 = vmatpush1.msra.mxu0 %v585
    %587 = vmatprep.subr.mxu0 0.0
    %v588 = vand.u32 %v76, 4294901760
    %v589 = vsub.f32 %v76, %v588
    %v590 = vand.u32 %v589, 4294901760
    %591 = vmatpush1.msra.mxu0 %v590
    %592 = vmatprep.subr.mxu0 0.0
    %593 = vmatpush1.msra.mxu0 0.0
    %594 = vmatprep.subr.mxu0 0.0
    %595 = vmatpush1.msra.mxu0 0.0
    %596 = vmatprep.subr.mxu0 0.0
    %597 = vmatpush1.msra.mxu0 0.0
    %598 = vmatprep.subr.mxu0 0.0
    %599 = vmatpush1.msra.mxu0 0.0
    %600 = vmatprep.subr.mxu0 0.0
    %601 = vmatpush1.msra.mxu0 0.0
    %602 = vmatprep.subr.mxu0 0.0
    %603 = vmatpush1.msra.mxu0 0.0
    %604 = vmatprep.subr.mxu0 0.0
    %605 = vmatpush1.msra.mxu0 0.0
    %606 = vmatprep.subr.mxu0 0.0
    %607 = vmatpush1.msra.mxu0 0.0
    %608 = vmatprep.subr.mxu0 0.0
    %609 = vmatpush1.msra.mxu0 0.0
    %610 = vmatprep.subr.mxu0 0.0
    %611 = vmatpush1.msra.mxu0 0.0
    %612 = vmatprep.subr.mxu0 0.0
    %613 = vmatpush1.msra.mxu0 0.0
    %614 = vmatprep.subr.mxu0 0.0
    %615 = vmatpush1.msra.mxu0 0.0
    %616 = vmatprep.subr.mxu0 0.0
    %617 = vmatpush1.msra.mxu0 0.0
    %618 = vmatprep.subr.mxu0 0.0
    %619 = vmatpush1.msra.mxu0 0.0
    %620 = vmatprep.subr.mxu0 0.0
    %621 = vmatpush1.msra.mxu0 0.0
    %622 = vmatprep.subr.mxu0 0.0
    %623 = vmatpush1.msra.mxu0 0.0
    %624 = vmatprep.mubr.f32.mxu0 0.0
    %v625 = vand.u32 %v60, 4294901760
    %626 = vmatmul.mubr.f32.gmra.mrb[0].mxu0 %v625
    %v627 = vpop.f32.mrb[0].mxu0
    %v628 = vadd.f32 %v509, %v627
    %v629 = vpop.f32.mrb[0].mxu0
    %630 = vdwg.mxu0
    %631 = vmatprep.subr.mxu0 0.0
    %v632 = vand.u32 %v61, 4294901760
    %633 = vmatpush1.msra.mxu0 %v632
    %634 = vmatprep.subr.mxu0 0.0
    %v635 = vand.u32 %v62, 4294901760
    %636 = vmatpush1.msra.mxu0 %v635
    %637 = vmatprep.subr.mxu0 0.0
    %v638 = vand.u32 %v63, 4294901760
    %639 = vmatpush1.msra.mxu0 %v638
    %640 = vmatprep.subr.mxu0 0.0
    %v641 = vand.u32 %v64, 4294901760
    %642 = vmatpush1.msra.mxu0 %v641
    %643 = vmatprep.subr.mxu0 0.0
    %v644 = vand.u32 %v65, 4294901760
    %645 = vmatpush1.msra.mxu0 %v644
    %646 = vmatprep.subr.mxu0 0.0
    %v647 = vand.u32 %v66, 4294901760
    %648 = vmatpush1.msra.mxu0 %v647
    %649 = vmatprep.subr.mxu0 0.0
    %v650 = vand.u32 %v67, 4294901760
    %651 = vmatpush1.msra.mxu0 %v650
    %652 = vmatprep.subr.mxu0 0.0
    %v653 = vand.u32 %v68, 4294901760
    %654 = vmatpush1.msra.mxu0 %v653
    %655 = vmatprep.subr.mxu0 0.0
    %v656 = vand.u32 %v69, 4294901760
    %657 = vmatpush1.msra.mxu0 %v656
    %658 = vmatprep.subr.mxu0 0.0
    %v659 = vand.u32 %v70, 4294901760
    %660 = vmatpush1.msra.mxu0 %v659
    %661 = vmatprep.subr.mxu0 0.0
    %v662 = vand.u32 %v71, 4294901760
    %663 = vmatpush1.msra.mxu0 %v662
    %664 = vmatprep.subr.mxu0 0.0
    %v665 = vand.u32 %v72, 4294901760
    %666 = vmatpush1.msra.mxu0 %v665
    %667 = vmatprep.subr.mxu0 0.0
    %v668 = vand.u32 %v73, 4294901760
    %669 = vmatpush1.msra.mxu0 %v668
    %670 = vmatprep.subr.mxu0 0.0
    %v671 = vand.u32 %v74, 4294901760
    %672 = vmatpush1.msra.mxu0 %v671
    %673 = vmatprep.subr.mxu0 0.0
    %v674 = vand.u32 %v75, 4294901760
    %675 = vmatpush1.msra.mxu0 %v674
    %676 = vmatprep.subr.mxu0 0.0
    %v677 = vand.u32 %v76, 4294901760
    %678 = vmatpush1.msra.mxu0 %v677
    %679 = vmatprep.subr.mxu0 0.0
    %680 = vmatpush1.msra.mxu0 0.0
    %681 = vmatprep.subr.mxu0 0.0
    %682 = vmatpush1.msra.mxu0 0.0
    %683 = vmatprep.subr.mxu0 0.0
    %684 = vmatpush1.msra.mxu0 0.0
    %685 = vmatprep.subr.mxu0 0.0
    %686 = vmatpush1.msra.mxu0 0.0
    %687 = vmatprep.subr.mxu0 0.0
    %688 = vmatpush1.msra.mxu0 0.0
    %689 = vmatprep.subr.mxu0 0.0
    %690 = vmatpush1.msra.mxu0 0.0
    %691 = vmatprep.subr.mxu0 0.0
    %692 = vmatpush1.msra.mxu0 0.0
    %693 = vmatprep.subr.mxu0 0.0
    %694 = vmatpush1.msra.mxu0 0.0
    %695 = vmatprep.subr.mxu0 0.0
    %696 = vmatpush1.msra.mxu0 0.0
    %697 = vmatprep.subr.mxu0 0.0
    %698 = vmatpush1.msra.mxu0 0.0
    %699 = vmatprep.subr.mxu0 0.0
    %700 = vmatpush1.msra.mxu0 0.0
    %701 = vmatprep.subr.mxu0 0.0
    %702 = vmatpush1.msra.mxu0 0.0
    %703 = vmatprep.subr.mxu0 0.0
    %704 = vmatpush1.msra.mxu0 0.0
    %705 = vmatprep.subr.mxu0 0.0
    %706 = vmatpush1.msra.mxu0 0.0
    %707 = vmatprep.subr.mxu0 0.0
    %708 = vmatpush1.msra.mxu0 0.0
    %709 = vmatprep.subr.mxu0 0.0
    %710 = vmatpush1.msra.mxu0 0.0
    %711 = vmatprep.mubr.f32.mxu0 0.0
    %v712 = vand.u32 %v60, 4294901760
    %713 = vmatmul.mubr.f32.gmra.mrb[0].mxu0 %v712
    %v714 = vpop.f32.mrb[0].mxu0
    %v715 = vadd.f32 %v628, %v714
    %v716 = vpop.f32.mrb[0].mxu0
    %717 = vdwg.mxu0
    %v718 = vsub.f32 %v60, %v715
    %v719 = vmul.f32 %v718, %v718
    %v720 = vld [vmem:[#allocation7] sm:$0xff]
    %v721 = vld [vmem:[#allocation7 + $0x8] sm:$0xff]
    %v722 = vld [vmem:[#allocation7 + $0x10] sm:$0xff]
    %v723 = vld [vmem:[#allocation7 + $0x18] sm:$0xff]
    %v724 = vld [vmem:[#allocation7 + $0x20] sm:$0xff]
    %v725 = vld [vmem:[#allocation7 + $0x28] sm:$0xff]
    %v726 = vld [vmem:[#allocation7 + $0x30] sm:$0xff]
    %v727 = vld [vmem:[#allocation7 + $0x38] sm:$0xff]
    %v728 = vld [vmem:[#allocation7 + $0x40] sm:$0xff]
    %v729 = vld [vmem:[#allocation7 + $0x48] sm:$0xff]
    %v730 = vld [vmem:[#allocation7 + $0x50] sm:$0xff]
    %v731 = vld [vmem:[#allocation7 + $0x58] sm:$0xff]
    %v732 = vld [vmem:[#allocation7 + $0x60] sm:$0xff]
    %v733 = vld [vmem:[#allocation7 + $0x68] sm:$0xff]
    %v734 = vld [vmem:[#allocation7 + $0x70] sm:$0xff]
    %v735 = vld [vmem:[#allocation7 + $0x78] sm:$0xff]
    %736 = vmatprep.subr.mxu0 0.0
    %v737 = vand.u32 %v720, 4294901760
    %738 = vmatpush1.msra.mxu0 %v737
    %739 = vmatprep.subr.mxu0 0.0
    %v740 = vand.u32 %v721, 4294901760
    %741 = vmatpush1.msra.mxu0 %v740
    %742 = vmatprep.subr.mxu0 0.0
    %v743 = vand.u32 %v722, 4294901760
    %744 = vmatpush1.msra.mxu0 %v743
    %745 = vmatprep.subr.mxu0 0.0
    %v746 = vand.u32 %v723, 4294901760
    %747 = vmatpush1.msra.mxu0 %v746
    %748 = vmatprep.subr.mxu0 0.0
    %v749 = vand.u32 %v724, 4294901760
    %750 = vmatpush1.msra.mxu0 %v749
    %751 = vmatprep.subr.mxu0 0.0
    %v752 = vand.u32 %v725, 4294901760
    %753 = vmatpush1.msra.mxu0 %v752
    %754 = vmatprep.subr.mxu0 0.0
    %v755 = vand.u32 %v726, 4294901760
    %756 = vmatpush1.msra.mxu0 %v755
    %757 = vmatprep.subr.mxu0 0.0
    %v758 = vand.u32 %v727, 4294901760
    %759 = vmatpush1.msra.mxu0 %v758
    %760 = vmatprep.subr.mxu0 0.0
    %v761 = vand.u32 %v728, 4294901760
    %762 = vmatpush1.msra.mxu0 %v761
    %763 = vmatprep.subr.mxu0 0.0
    %v764 = vand.u32 %v729, 4294901760
    %765 = vmatpush1.msra.mxu0 %v764
    %766 = vmatprep.subr.mxu0 0.0
    %v767 = vand.u32 %v730, 4294901760
    %768 = vmatpush1.msra.mxu0 %v767
    %769 = vmatprep.subr.mxu0 0.0
    %v770 = vand.u32 %v731, 4294901760
    %771 = vmatpush1.msra.mxu0 %v770
    %772 = vmatprep.subr.mxu0 0.0
    %v773 = vand.u32 %v732, 4294901760
    %774 = vmatpush1.msra.mxu0 %v773
    %775 = vmatprep.subr.mxu0 0.0
    %v776 = vand.u32 %v733, 4294901760
    %777 = vmatpush1.msra.mxu0 %v776
    %778 = vmatprep.subr.mxu0 0.0
    %v779 = vand.u32 %v734, 4294901760
    %780 = vmatpush1.msra.mxu0 %v779
    %781 = vmatprep.subr.mxu0 0.0
    %v782 = vand.u32 %v735, 4294901760
    %783 = vmatpush1.msra.mxu0 %v782
    %784 = vmatprep.subr.mxu0 0.0
    %785 = vmatpush1.msra.mxu0 0.0
    %786 = vmatprep.subr.mxu0 0.0
    %787 = vmatpush1.msra.mxu0 0.0
    %788 = vmatprep.subr.mxu0 0.0
    %789 = vmatpush1.msra.mxu0 0.0
    %790 = vmatprep.subr.mxu0 0.0
    %791 = vmatpush1.msra.mxu0 0.0
    %792 = vmatprep.subr.mxu0 0.0
    %793 = vmatpush1.msra.mxu0 0.0
    %794 = vmatprep.subr.mxu0 0.0
    %795 = vmatpush1.msra.mxu0 0.0
    %796 = vmatprep.subr.mxu0 0.0
    %797 = vmatpush1.msra.mxu0 0.0
    %798 = vmatprep.subr.mxu0 0.0
    %799 = vmatpush1.msra.mxu0 0.0
    %800 = vmatprep.subr.mxu0 0.0
    %801 = vmatpush1.msra.mxu0 0.0
    %802 = vmatprep.subr.mxu0 0.0
    %803 = vmatpush1.msra.mxu0 0.0
    %804 = vmatprep.subr.mxu0 0.0
    %805 = vmatpush1.msra.mxu0 0.0
    %806 = vmatprep.subr.mxu0 0.0
    %807 = vmatpush1.msra.mxu0 0.0
    %808 = vmatprep.subr.mxu0 0.0
    %809 = vmatpush1.msra.mxu0 0.0
    %810 = vmatprep.subr.mxu0 0.0
    %811 = vmatpush1.msra.mxu0 0.0
    %812 = vmatprep.subr.mxu0 0.0
    %813 = vmatpush1.msra.mxu0 0.0
    %814 = vmatprep.subr.mxu0 0.0
    %815 = vmatpush1.msra.mxu0 0.0
    %816 = vmatprep.mubr.f32.mxu0 0.0
    %v817 = vand.u32 %v719, 4294901760
    %v818 = vsub.f32 %v719, %v817
    %v819 = vand.u32 %v818, 4294901760
    %v820 = vsub.f32 %v818, %v819
    %v821 = vand.u32 %v820, 4294901760
    %822 = vmatmul.mubr.f32.gmra.mrb[0].mxu0 %v821
    %v823 = vpop.f32.mrb[0].mxu0
    %v824 = vadd.f32 0.0, %v823
    %v825 = vpop.f32.mrb[0].mxu0
    %826 = vdwg.mxu0
    %827 = vmatprep.subr.mxu0 0.0
    %v828 = vand.u32 %v720, 4294901760
    %v829 = vsub.f32 %v720, %v828
    %v830 = vand.u32 %v829, 4294901760
    %v831 = vsub.f32 %v829, %v830
    %v832 = vand.u32 %v831, 4294901760
    %833 = vmatpush1.msra.mxu0 %v832
    %834 = vmatprep.subr.mxu0 0.0
    %v835 = vand.u32 %v721, 4294901760
    %v836 = vsub.f32 %v721, %v835
    %v837 = vand.u32 %v836, 4294901760
    %v838 = vsub.f32 %v836, %v837
    %v839 = vand.u32 %v838, 4294901760
    %840 = vmatpush1.msra.mxu0 %v839
    %841 = vmatprep.subr.mxu0 0.0
    %v842 = vand.u32 %v722, 4294901760
    %v843 = vsub.f32 %v722, %v842
    %v844 = vand.u32 %v843, 4294901760
    %v845 = vsub.f32 %v843, %v844
    %v846 = vand.u32 %v845, 4294901760
    %847 = vmatpush1.msra.mxu0 %v846
    %848 = vmatprep.subr.mxu0 0.0
    %v849 = vand.u32 %v723, 4294901760
    %v850 = vsub.f32 %v723, %v849
    %v851 = vand.u32 %v850, 4294901760
    %v852 = vsub.f32 %v850, %v851
    %v853 = vand.u32 %v852, 4294901760
    %854 = vmatpush1.msra.mxu0 %v853
    %855 = vmatprep.subr.mxu0 0.0
    %v856 = vand.u32 %v724, 4294901760
    %v857 = vsub.f32 %v724, %v856
    %v858 = vand.u32 %v857, 4294901760
    %v859 = vsub.f32 %v857, %v858
    %v860 = vand.u32 %v859, 4294901760
    %861 = vmatpush1.msra.mxu0 %v860
    %862 = vmatprep.subr.mxu0 0.0
    %v863 = vand.u32 %v725, 4294901760
    %v864 = vsub.f32 %v725, %v863
    %v865 = vand.u32 %v864, 4294901760
    %v866 = vsub.f32 %v864, %v865
    %v867 = vand.u32 %v866, 4294901760
    %868 = vmatpush1.msra.mxu0 %v867
    %869 = vmatprep.subr.mxu0 0.0
    %v870 = vand.u32 %v726, 4294901760
    %v871 = vsub.f32 %v726, %v870
    %v872 = vand.u32 %v871, 4294901760
    %v873 = vsub.f32 %v871, %v872
    %v874 = vand.u32 %v873, 4294901760
    %875 = vmatpush1.msra.mxu0 %v874
    %876 = vmatprep.subr.mxu0 0.0
    %v877 = vand.u32 %v727, 4294901760
    %v878 = vsub.f32 %v727, %v877
    %v879 = vand.u32 %v878, 4294901760
    %v880 = vsub.f32 %v878, %v879
    %v881 = vand.u32 %v880, 4294901760
    %882 = vmatpush1.msra.mxu0 %v881
    %883 = vmatprep.subr.mxu0 0.0
    %v884 = vand.u32 %v728, 4294901760
    %v885 = vsub.f32 %v728, %v884
    %v886 = vand.u32 %v885, 4294901760
    %v887 = vsub.f32 %v885, %v886
    %v888 = vand.u32 %v887, 4294901760
    %889 = vmatpush1.msra.mxu0 %v888
    %890 = vmatprep.subr.mxu0 0.0
    %v891 = vand.u32 %v729, 4294901760
    %v892 = vsub.f32 %v729, %v891
    %v893 = vand.u32 %v892, 4294901760
    %v894 = vsub.f32 %v892, %v893
    %v895 = vand.u32 %v894, 4294901760
    %896 = vmatpush1.msra.mxu0 %v895
    %897 = vmatprep.subr.mxu0 0.0
    %v898 = vand.u32 %v730, 4294901760
    %v899 = vsub.f32 %v730, %v898
    %v900 = vand.u32 %v899, 4294901760
    %v901 = vsub.f32 %v899, %v900
    %v902 = vand.u32 %v901, 4294901760
    %903 = vmatpush1.msra.mxu0 %v902
    %904 = vmatprep.subr.mxu0 0.0
    %v905 = vand.u32 %v731, 4294901760
    %v906 = vsub.f32 %v731, %v905
    %v907 = vand.u32 %v906, 4294901760
    %v908 = vsub.f32 %v906, %v907
    %v909 = vand.u32 %v908, 4294901760
    %910 = vmatpush1.msra.mxu0 %v909
    %911 = vmatprep.subr.mxu0 0.0
    %v912 = vand.u32 %v732, 4294901760
    %v913 = vsub.f32 %v732, %v912
    %v914 = vand.u32 %v913, 4294901760
    %v915 = vsub.f32 %v913, %v914
    %v916 = vand.u32 %v915, 4294901760
    %917 = vmatpush1.msra.mxu0 %v916
    %918 = vmatprep.subr.mxu0 0.0
    %v919 = vand.u32 %v733, 4294901760
    %v920 = vsub.f32 %v733, %v919
    %v921 = vand.u32 %v920, 4294901760
    %v922 = vsub.f32 %v920, %v921
    %v923 = vand.u32 %v922, 4294901760
    %924 = vmatpush1.msra.mxu0 %v923
    %925 = vmatprep.subr.mxu0 0.0
    %v926 = vand.u32 %v734, 4294901760
    %v927 = vsub.f32 %v734, %v926
    %v928 = vand.u32 %v927, 4294901760
    %v929 = vsub.f32 %v927, %v928
    %v930 = vand.u32 %v929, 4294901760
    %931 = vmatpush1.msra.mxu0 %v930
    %932 = vmatprep.subr.mxu0 0.0
    %v933 = vand.u32 %v735, 4294901760
    %v934 = vsub.f32 %v735, %v933
    %v935 = vand.u32 %v934, 4294901760
    %v936 = vsub.f32 %v934, %v935
    %v937 = vand.u32 %v936, 4294901760
    %938 = vmatpush1.msra.mxu0 %v937
    %939 = vmatprep.subr.mxu0 0.0
    %940 = vmatpush1.msra.mxu0 0.0
    %941 = vmatprep.subr.mxu0 0.0
    %942 = vmatpush1.msra.mxu0 0.0
    %943 = vmatprep.subr.mxu0 0.0
    %944 = vmatpush1.msra.mxu0 0.0
    %945 = vmatprep.subr.mxu0 0.0
    %946 = vmatpush1.msra.mxu0 0.0
    %947 = vmatprep.subr.mxu0 0.0
    %948 = vmatpush1.msra.mxu0 0.0
    %949 = vmatprep.subr.mxu0 0.0
    %950 = vmatpush1.msra.mxu0 0.0
    %951 = vmatprep.subr.mxu0 0.0
    %952 = vmatpush1.msra.mxu0 0.0
    %953 = vmatprep.subr.mxu0 0.0
    %954 = vmatpush1.msra.mxu0 0.0
    %955 = vmatprep.subr.mxu0 0.0
    %956 = vmatpush1.msra.mxu0 0.0
    %957 = vmatprep.subr.mxu0 0.0
    %958 = vmatpush1.msra.mxu0 0.0
    %959 = vmatprep.subr.mxu0 0.0
    %960 = vmatpush1.msra.mxu0 0.0
    %961 = vmatprep.subr.mxu0 0.0
    %962 = vmatpush1.msra.mxu0 0.0
    %963 = vmatprep.subr.mxu0 0.0
    %964 = vmatpush1.msra.mxu0 0.0
    %965 = vmatprep.subr.mxu0 0.0
    %966 = vmatpush1.msra.mxu0 0.0
    %967 = vmatprep.subr.mxu0 0.0
    %968 = vmatpush1.msra.mxu0 0.0
    %969 = vmatprep.subr.mxu0 0.0
    %970 = vmatpush1.msra.mxu0 0.0
    %971 = vmatprep.mubr.f32.mxu0 0.0
    %v972 = vand.u32 %v719, 4294901760
    %973 = vmatmul.mubr.f32.gmra.mrb[0].mxu0 %v972
    %v974 = vpop.f32.mrb[0].mxu0
    %v975 = vadd.f32 %v824, %v974
    %v976 = vpop.f32.mrb[0].mxu0
    %977 = vdwg.mxu0
    %978 = vmatprep.subr.mxu0 0.0
    %v979 = vand.u32 %v720, 4294901760
    %v980 = vsub.f32 %v720, %v979
    %981 = vmatpush1.msra.mxu0 %v980
    %982 = vmatprep.subr.mxu0 0.0
    %v983 = vand.u32 %v721, 4294901760
    %v984 = vsub.f32 %v721, %v983
    %985 = vmatpush1.msra.mxu0 %v984
    %986 = vmatprep.subr.mxu0 0.0
    %v987 = vand.u32 %v722, 4294901760
    %v988 = vsub.f32 %v722, %v987
    %989 = vmatpush1.msra.mxu0 %v988
    %990 = vmatprep.subr.mxu0 0.0
    %v991 = vand.u32 %v723, 4294901760
    %v992 = vsub.f32 %v723, %v991
    %993 = vmatpush1.msra.mxu0 %v992
    %994 = vmatprep.subr.mxu0 0.0
    %v995 = vand.u32 %v724, 4294901760
    %v996 = vsub.f32 %v724, %v995
    %997 = vmatpush1.msra.mxu0 %v996
    %998 = vmatprep.subr.mxu0 0.0
    %v999 = vand.u32 %v725, 4294901760
    %v1000 = vsub.f32 %v725, %v999
    %1001 = vmatpush1.msra.mxu0 %v1000
    %1002 = vmatprep.subr.mxu0 0.0
    %v1003 = vand.u32 %v726, 4294901760
    %v1004 = vsub.f32 %v726, %v1003
    %1005 = vmatpush1.msra.mxu0 %v1004
    %1006 = vmatprep.subr.mxu0 0.0
    %v1007 = vand.u32 %v727, 4294901760
    %v1008 = vsub.f32 %v727, %v1007
    %1009 = vmatpush1.msra.mxu0 %v1008
    %1010 = vmatprep.subr.mxu0 0.0
    %v1011 = vand.u32 %v728, 4294901760
    %v1012 = vsub.f32 %v728, %v1011
    %1013 = vmatpush1.msra.mxu0 %v1012
    %1014 = vmatprep.subr.mxu0 0.0
    %v1015 = vand.u32 %v729, 4294901760
    %v1016 = vsub.f32 %v729, %v1015
    %1017 = vmatpush1.msra.mxu0 %v1016
    %1018 = vmatprep.subr.mxu0 0.0
    %v1019 = vand.u32 %v730, 4294901760
    %v1020 = vsub.f32 %v730, %v1019
    %1021 = vmatpush1.msra.mxu0 %v1020
    %1022 = vmatprep.subr.mxu0 0.0
    %v1023 = vand.u32 %v731, 4294901760
    %v1024 = vsub.f32 %v731, %v1023
    %1025 = vmatpush1.msra.mxu0 %v1024
    %1026 = vmatprep.subr.mxu0 0.0
    %v1027 = vand.u32 %v732, 4294901760
    %v1028 = vsub.f32 %v732, %v1027
    %1029 = vmatpush1.msra.mxu0 %v1028
    %1030 = vmatprep.subr.mxu0 0.0
    %v1031 = vand.u32 %v733, 4294901760
    %v1032 = vsub.f32 %v733, %v1031
    %1033 = vmatpush1.msra.mxu0 %v1032
    %1034 = vmatprep.subr.mxu0 0.0
    %v1035 = vand.u32 %v734, 4294901760
    %v1036 = vsub.f32 %v734, %v1035
    %1037 = vmatpush1.msra.mxu0 %v1036
    %1038 = vmatprep.subr.mxu0 0.0
    %v1039 = vand.u32 %v735, 4294901760
    %v1040 = vsub.f32 %v735, %v1039
    %1041 = vmatpush1.msra.mxu0 %v1040
    %1042 = vmatprep.subr.mxu0 0.0
    %1043 = vmatpush1.msra.mxu0 0.0
    %1044 = vmatprep.subr.mxu0 0.0
    %1045 = vmatpush1.msra.mxu0 0.0
    %1046 = vmatprep.subr.mxu0 0.0
    %1047 = vmatpush1.msra.mxu0 0.0
    %1048 = vmatprep.subr.mxu0 0.0
    %1049 = vmatpush1.msra.mxu0 0.0
    %1050 = vmatprep.subr.mxu0 0.0
    %1051 = vmatpush1.msra.mxu0 0.0
    %1052 = vmatprep.subr.mxu0 0.0
    %1053 = vmatpush1.msra.mxu0 0.0
    %1054 = vmatprep.subr.mxu0 0.0
    %1055 = vmatpush1.msra.mxu0 0.0
    %1056 = vmatprep.subr.mxu0 0.0
    %1057 = vmatpush1.msra.mxu0 0.0
    %1058 = vmatprep.subr.mxu0 0.0
    %1059 = vmatpush1.msra.mxu0 0.0
    %1060 = vmatprep.subr.mxu0 0.0
    %1061 = vmatpush1.msra.mxu0 0.0
    %1062 = vmatprep.subr.mxu0 0.0
    %1063 = vmatpush1.msra.mxu0 0.0
    %1064 = vmatprep.subr.mxu0 0.0
    %1065 = vmatpush1.msra.mxu0 0.0
    %1066 = vmatprep.subr.mxu0 0.0
    %1067 = vmatpush1.msra.mxu0 0.0
    %1068 = vmatprep.subr.mxu0 0.0
    %1069 = vmatpush1.msra.mxu0 0.0
    %1070 = vmatprep.subr.mxu0 0.0
    %1071 = vmatpush1.msra.mxu0 0.0
    %1072 = vmatprep.subr.mxu0 0.0
    %1073 = vmatpush1.msra.mxu0 0.0
    %1074 = vmatprep.mubr.f32.mxu0 0.0
    %v1075 = vand.u32 %v719, 4294901760
    %v1076 = vsub.f32 %v719, %v1075
    %1077 = vmatmul.mubr.f32.gmra.mrb[0].mxu0 %v1076
    %v1078 = vpop.f32.mrb[0].mxu0
    %v1079 = vadd.f32 %v975, %v1078
    %v1080 = vpop.f32.mrb[0].mxu0
    %1081 = vdwg.mxu0
    %1082 = vmatprep.subr.mxu0 0.0
    %v1083 = vand.u32 %v720, 4294901760
    %1084 = vmatpush1.msra.mxu0 %v1083
    %1085 = vmatprep.subr.mxu0 0.0
    %v1086 = vand.u32 %v721, 4294901760
    %1087 = vmatpush1.msra.mxu0 %v1086
    %1088 = vmatprep.subr.mxu0 0.0
    %v1089 = vand.u32 %v722, 4294901760
    %1090 = vmatpush1.msra.mxu0 %v1089
    %1091 = vmatprep.subr.mxu0 0.0
    %v1092 = vand.u32 %v723, 4294901760
    %1093 = vmatpush1.msra.mxu0 %v1092
    %1094 = vmatprep.subr.mxu0 0.0
    %v1095 = vand.u32 %v724, 4294901760
    %1096 = vmatpush1.msra.mxu0 %v1095
    %1097 = vmatprep.subr.mxu0 0.0
    %v1098 = vand.u32 %v725, 4294901760
    %1099 = vmatpush1.msra.mxu0 %v1098
    %1100 = vmatprep.subr.mxu0 0.0
    %v1101 = vand.u32 %v726, 4294901760
    %1102 = vmatpush1.msra.mxu0 %v1101
    %1103 = vmatprep.subr.mxu0 0.0
    %v1104 = vand.u32 %v727, 4294901760
    %1105 = vmatpush1.msra.mxu0 %v1104
    %1106 = vmatprep.subr.mxu0 0.0
    %v1107 = vand.u32 %v728, 4294901760
    %1108 = vmatpush1.msra.mxu0 %v1107
    %1109 = vmatprep.subr.mxu0 0.0
    %v1110 = vand.u32 %v729, 4294901760
    %1111 = vmatpush1.msra.mxu0 %v1110
    %1112 = vmatprep.subr.mxu0 0.0
    %v1113 = vand.u32 %v730, 4294901760
    %1114 = vmatpush1.msra.mxu0 %v1113
    %1115 = vmatprep.subr.mxu0 0.0
    %v1116 = vand.u32 %v731, 4294901760
    %1117 = vmatpush1.msra.mxu0 %v1116
    %1118 = vmatprep.subr.mxu0 0.0
    %v1119 = vand.u32 %v732, 4294901760
    %1120 = vmatpush1.msra.mxu0 %v1119
    %1121 = vmatprep.subr.mxu0 0.0
    %v1122 = vand.u32 %v733, 4294901760
    %1123 = vmatpush1.msra.mxu0 %v1122
    %1124 = vmatprep.subr.mxu0 0.0
    %v1125 = vand.u32 %v734, 4294901760
    %1126 = vmatpush1.msra.mxu0 %v1125
    %1127 = vmatprep.subr.mxu0 0.0
    %v1128 = vand.u32 %v735, 4294901760
    %1129 = vmatpush1.msra.mxu0 %v1128
    %1130 = vmatprep.subr.mxu0 0.0
    %1131 = vmatpush1.msra.mxu0 0.0
    %1132 = vmatprep.subr.mxu0 0.0
    %1133 = vmatpush1.msra.mxu0 0.0
    %1134 = vmatprep.subr.mxu0 0.0
    %1135 = vmatpush1.msra.mxu0 0.0
    %1136 = vmatprep.subr.mxu0 0.0
    %1137 = vmatpush1.msra.mxu0 0.0
    %1138 = vmatprep.subr.mxu0 0.0
    %1139 = vmatpush1.msra.mxu0 0.0
    %1140 = vmatprep.subr.mxu0 0.0
    %1141 = vmatpush1.msra.mxu0 0.0
    %1142 = vmatprep.subr.mxu0 0.0
    %1143 = vmatpush1.msra.mxu0 0.0
    %1144 = vmatprep.subr.mxu0 0.0
    %1145 = vmatpush1.msra.mxu0 0.0
    %1146 = vmatprep.subr.mxu0 0.0
    %1147 = vmatpush1.msra.mxu0 0.0
    %1148 = vmatprep.subr.mxu0 0.0
    %1149 = vmatpush1.msra.mxu0 0.0
    %1150 = vmatprep.subr.mxu0 0.0
    %1151 = vmatpush1.msra.mxu0 0.0
    %1152 = vmatprep.subr.mxu0 0.0
    %1153 = vmatpush1.msra.mxu0 0.0
    %1154 = vmatprep.subr.mxu0 0.0
    %1155 = vmatpush1.msra.mxu0 0.0
    %1156 = vmatprep.subr.mxu0 0.0
    %1157 = vmatpush1.msra.mxu0 0.0
    %1158 = vmatprep.subr.mxu0 0.0
    %1159 = vmatpush1.msra.mxu0 0.0
    %1160 = vmatprep.subr.mxu0 0.0
    %1161 = vmatpush1.msra.mxu0 0.0
    %1162 = vmatprep.mubr.f32.mxu0 0.0
    %v1163 = vand.u32 %v719, 4294901760
    %v1164 = vsub.f32 %v719, %v1163
    %v1165 = vand.u32 %v1164, 4294901760
    %1166 = vmatmul.mubr.f32.gmra.mrb[0].mxu0 %v1165
    %v1167 = vpop.f32.mrb[0].mxu0
    %v1168 = vadd.f32 %v1079, %v1167
    %v1169 = vpop.f32.mrb[0].mxu0
    %1170 = vdwg.mxu0
    %1171 = vmatprep.subr.mxu0 0.0
    %v1172 = vand.u32 %v720, 4294901760
    %v1173 = vsub.f32 %v720, %v1172
    %v1174 = vand.u32 %v1173, 4294901760
    %1175 = vmatpush1.msra.mxu0 %v1174
    %1176 = vmatprep.subr.mxu0 0.0
    %v1177 = vand.u32 %v721, 4294901760
    %v1178 = vsub.f32 %v721, %v1177
    %v1179 = vand.u32 %v1178, 4294901760
    %1180 = vmatpush1.msra.mxu0 %v1179
    %1181 = vmatprep.subr.mxu0 0.0
    %v1182 = vand.u32 %v722, 4294901760
    %v1183 = vsub.f32 %v722, %v1182
    %v1184 = vand.u32 %v1183, 4294901760
    %1185 = vmatpush1.msra.mxu0 %v1184
    %1186 = vmatprep.subr.mxu0 0.0
    %v1187 = vand.u32 %v723, 4294901760
    %v1188 = vsub.f32 %v723, %v1187
    %v1189 = vand.u32 %v1188, 4294901760
    %1190 = vmatpush1.msra.mxu0 %v1189
    %1191 = vmatprep.subr.mxu0 0.0
    %v1192 = vand.u32 %v724, 4294901760
    %v1193 = vsub.f32 %v724, %v1192
    %v1194 = vand.u32 %v1193, 4294901760
    %1195 = vmatpush1.msra.mxu0 %v1194
    %1196 = vmatprep.subr.mxu0 0.0
    %v1197 = vand.u32 %v725, 4294901760
    %v1198 = vsub.f32 %v725, %v1197
    %v1199 = vand.u32 %v1198, 4294901760
    %1200 = vmatpush1.msra.mxu0 %v1199
    %1201 = vmatprep.subr.mxu0 0.0
    %v1202 = vand.u32 %v726, 4294901760
    %v1203 = vsub.f32 %v726, %v1202
    %v1204 = vand.u32 %v1203, 4294901760
    %1205 = vmatpush1.msra.mxu0 %v1204
    %1206 = vmatprep.subr.mxu0 0.0
    %v1207 = vand.u32 %v727, 4294901760
    %v1208 = vsub.f32 %v727, %v1207
    %v1209 = vand.u32 %v1208, 4294901760
    %1210 = vmatpush1.msra.mxu0 %v1209
    %1211 = vmatprep.subr.mxu0 0.0
    %v1212 = vand.u32 %v728, 4294901760
    %v1213 = vsub.f32 %v728, %v1212
    %v1214 = vand.u32 %v1213, 4294901760
    %1215 = vmatpush1.msra.mxu0 %v1214
    %1216 = vmatprep.subr.mxu0 0.0
    %v1217 = vand.u32 %v729, 4294901760
    %v1218 = vsub.f32 %v729, %v1217
    %v1219 = vand.u32 %v1218, 4294901760
    %1220 = vmatpush1.msra.mxu0 %v1219
    %1221 = vmatprep.subr.mxu0 0.0
    %v1222 = vand.u32 %v730, 4294901760
    %v1223 = vsub.f32 %v730, %v1222
    %v1224 = vand.u32 %v1223, 4294901760
    %1225 = vmatpush1.msra.mxu0 %v1224
    %1226 = vmatprep.subr.mxu0 0.0
    %v1227 = vand.u32 %v731, 4294901760
    %v1228 = vsub.f32 %v731, %v1227
    %v1229 = vand.u32 %v1228, 4294901760
    %1230 = vmatpush1.msra.mxu0 %v1229
    %1231 = vmatprep.subr.mxu0 0.0
    %v1232 = vand.u32 %v732, 4294901760
    %v1233 = vsub.f32 %v732, %v1232
    %v1234 = vand.u32 %v1233, 4294901760
    %1235 = vmatpush1.msra.mxu0 %v1234
    %1236 = vmatprep.subr.mxu0 0.0
    %v1237 = vand.u32 %v733, 4294901760
    %v1238 = vsub.f32 %v733, %v1237
    %v1239 = vand.u32 %v1238, 4294901760
    %1240 = vmatpush1.msra.mxu0 %v1239
    %1241 = vmatprep.subr.mxu0 0.0
    %v1242 = vand.u32 %v734, 4294901760
    %v1243 = vsub.f32 %v734, %v1242
    %v1244 = vand.u32 %v1243, 4294901760
    %1245 = vmatpush1.msra.mxu0 %v1244
    %1246 = vmatprep.subr.mxu0 0.0
    %v1247 = vand.u32 %v735, 4294901760
    %v1248 = vsub.f32 %v735, %v1247
    %v1249 = vand.u32 %v1248, 4294901760
    %1250 = vmatpush1.msra.mxu0 %v1249
    %1251 = vmatprep.subr.mxu0 0.0
    %1252 = vmatpush1.msra.mxu0 0.0
    %1253 = vmatprep.subr.mxu0 0.0
    %1254 = vmatpush1.msra.mxu0 0.0
    %1255 = vmatprep.subr.mxu0 0.0
    %1256 = vmatpush1.msra.mxu0 0.0
    %1257 = vmatprep.subr.mxu0 0.0
    %1258 = vmatpush1.msra.mxu0 0.0
    %1259 = vmatprep.subr.mxu0 0.0
    %1260 = vmatpush1.msra.mxu0 0.0
    %1261 = vmatprep.subr.mxu0 0.0
    %1262 = vmatpush1.msra.mxu0 0.0
    %1263 = vmatprep.subr.mxu0 0.0
    %1264 = vmatpush1.msra.mxu0 0.0
    %1265 = vmatprep.subr.mxu0 0.0
    %1266 = vmatpush1.msra.mxu0 0.0
    %1267 = vmatprep.subr.mxu0 0.0
    %1268 = vmatpush1.msra.mxu0 0.0
    %1269 = vmatprep.subr.mxu0 0.0
    %1270 = vmatpush1.msra.mxu0 0.0
    %1271 = vmatprep.subr.mxu0 0.0
    %1272 = vmatpush1.msra.mxu0 0.0
    %1273 = vmatprep.subr.mxu0 0.0
    %1274 = vmatpush1.msra.mxu0 0.0
    %1275 = vmatprep.subr.mxu0 0.0
    %1276 = vmatpush1.msra.mxu0 0.0
    %1277 = vmatprep.subr.mxu0 0.0
    %1278 = vmatpush1.msra.mxu0 0.0
    %1279 = vmatprep.subr.mxu0 0.0
    %1280 = vmatpush1.msra.mxu0 0.0
    %1281 = vmatprep.subr.mxu0 0.0
    %1282 = vmatpush1.msra.mxu0 0.0
    %1283 = vmatprep.mubr.f32.mxu0 0.0
    %v1284 = vand.u32 %v719, 4294901760
    %1285 = vmatmul.mubr.f32.gmra.mrb[0].mxu0 %v1284
    %v1286 = vpop.f32.mrb[0].mxu0
    %v1287 = vadd.f32 %v1168, %v1286
    %v1288 = vpop.f32.mrb[0].mxu0
    %1289 = vdwg.mxu0
    %1290 = vmatprep.subr.mxu0 0.0
    %v1291 = vand.u32 %v720, 4294901760
    %1292 = vmatpush1.msra.mxu0 %v1291
    %1293 = vmatprep.subr.mxu0 0.0
    %v1294 = vand.u32 %v721, 4294901760
    %1295 = vmatpush1.msra.mxu0 %v1294
    %1296 = vmatprep.subr.mxu0 0.0
    %v1297 = vand.u32 %v722, 4294901760
    %1298 = vmatpush1.msra.mxu0 %v1297
    %1299 = vmatprep.subr.mxu0 0.0
    %v1300 = vand.u32 %v723, 4294901760
    %1301 = vmatpush1.msra.mxu0 %v1300
    %1302 = vmatprep.subr.mxu0 0.0
    %v1303 = vand.u32 %v724, 4294901760
    %1304 = vmatpush1.msra.mxu0 %v1303
    %1305 = vmatprep.subr.mxu0 0.0
    %v1306 = vand.u32 %v725, 4294901760
    %1307 = vmatpush1.msra.mxu0 %v1306
    %1308 = vmatprep.subr.mxu0 0.0
    %v1309 = vand.u32 %v726, 4294901760
    %1310 = vmatpush1.msra.mxu0 %v1309
    %1311 = vmatprep.subr.mxu0 0.0
    %v1312 = vand.u32 %v727, 4294901760
    %1313 = vmatpush1.msra.mxu0 %v1312
    %1314 = vmatprep.subr.mxu0 0.0
    %v1315 = vand.u32 %v728, 4294901760
    %1316 = vmatpush1.msra.mxu0 %v1315
    %1317 = vmatprep.subr.mxu0 0.0
    %v1318 = vand.u32 %v729, 4294901760
    %1319 = vmatpush1.msra.mxu0 %v1318
    %1320 = vmatprep.subr.mxu0 0.0
    %v1321 = vand.u32 %v730, 4294901760
    %1322 = vmatpush1.msra.mxu0 %v1321
    %1323 = vmatprep.subr.mxu0 0.0
    %v1324 = vand.u32 %v731, 4294901760
    %1325 = vmatpush1.msra.mxu0 %v1324
    %1326 = vmatprep.subr.mxu0 0.0
    %v1327 = vand.u32 %v732, 4294901760
    %1328 = vmatpush1.msra.mxu0 %v1327
    %1329 = vmatprep.subr.mxu0 0.0
    %v1330 = vand.u32 %v733, 4294901760
    %1331 = vmatpush1.msra.mxu0 %v1330
    %1332 = vmatprep.subr.mxu0 0.0
    %v1333 = vand.u32 %v734, 4294901760
    %1334 = vmatpush1.msra.mxu0 %v1333
    %1335 = vmatprep.subr.mxu0 0.0
    %v1336 = vand.u32 %v735, 4294901760
    %1337 = vmatpush1.msra.mxu0 %v1336
    %1338 = vmatprep.subr.mxu0 0.0
    %1339 = vmatpush1.msra.mxu0 0.0
    %1340 = vmatprep.subr.mxu0 0.0
    %1341 = vmatpush1.msra.mxu0 0.0
    %1342 = vmatprep.subr.mxu0 0.0
    %1343 = vmatpush1.msra.mxu0 0.0
    %1344 = vmatprep.subr.mxu0 0.0
    %1345 = vmatpush1.msra.mxu0 0.0
    %1346 = vmatprep.subr.mxu0 0.0
    %1347 = vmatpush1.msra.mxu0 0.0
    %1348 = vmatprep.subr.mxu0 0.0
    %1349 = vmatpush1.msra.mxu0 0.0
    %1350 = vmatprep.subr.mxu0 0.0
    %1351 = vmatpush1.msra.mxu0 0.0
    %1352 = vmatprep.subr.mxu0 0.0
    %1353 = vmatpush1.msra.mxu0 0.0
    %1354 = vmatprep.subr.mxu0 0.0
    %1355 = vmatpush1.msra.mxu0 0.0
    %1356 = vmatprep.subr.mxu0 0.0
    %1357 = vmatpush1.msra.mxu0 0.0
    %1358 = vmatprep.subr.mxu0 0.0
    %1359 = vmatpush1.msra.mxu0 0.0
    %1360 = vmatprep.subr.mxu0 0.0
    %1361 = vmatpush1.msra.mxu0 0.0
    %1362 = vmatprep.subr.mxu0 0.0
    %1363 = vmatpush1.msra.mxu0 0.0
    %1364 = vmatprep.subr.mxu0 0.0
    %1365 = vmatpush1.msra.mxu0 0.0
    %1366 = vmatprep.subr.mxu0 0.0
    %1367 = vmatpush1.msra.mxu0 0.0
    %1368 = vmatprep.subr.mxu0 0.0
    %1369 = vmatpush1.msra.mxu0 0.0
    %1370 = vmatprep.mubr.f32.mxu0 0.0
    %v1371 = vand.u32 %v719, 4294901760
    %1372 = vmatmul.mubr.f32.gmra.mrb[0].mxu0 %v1371
    %v1373 = vpop.f32.mrb[0].mxu0
    %v1374 = vadd.f32 %v1287, %v1373
    %v1375 = vpop.f32.mrb[0].mxu0
    %1376 = vdwg.mxu0
    %v1377 = vrsqrt.pop %v1374
    %v1378 = vmul.f32 %v1374, %v1377
    %vm1379 = vcmp.eq.f32.partialorder %v1374, inf
    %v1380 = vsel %vm1379, %v1374, %v1378
    %vm1381 = vcmp.eq.f32.partialorder %v1374, 0.0
    %v1382 = vand.u32 %v1374, 2147483648
    %v1383 = vsel %vm1381, %v1382, %v1380
    %v1384 = vadd.f32 %v1383, 1e-06
    %v1385 = vrcp.pop %v1384
    %v1386 = vmul.f32 %v718, %v1385
    %v1387 = vld [vmem:[%s1] sm:$0x1]
    %v1389 = vlaneseq
    %v1390 = vshrl.u32 %v1389, 7
    %v1391 = vsub.s32 0, %v1390
    %v1392 = vrot.slane %v1387, %v1391
    %v1394 = vmul.f32 %v1386, %v1392
    %v1395 = vld [vmem:[%s2] sm:$0x1]
    %v1397 = vlaneseq
    %v1398 = vshrl.u32 %v1397, 7
    %v1399 = vsub.s32 0, %v1398
    %v1400 = vrot.slane %v1395, %v1399
    %v1402 = vadd.f32 %v1394, %v1400
    %1403 = vst [vmem:[#allocation8] sm:$0xf] %v1402
    // Predicated region
    $region34: #{tpu_custom_call.1} parent=1 // pred_check
      _
    $region35: #{tpu_custom_call.1} parent=1 // pred_check_branch
      %1405 = sbr.rel (0) target = $region37
    $region36: #{tpu_custom_call.1} parent=1 // pred_region
      %s1407 = ssub.s32 64, 64
      %1408 = vsyncadd [#allocation4], %s1407
      %s1410 = sshll.u32 [#allocation8], 4
      %s1411 = int_to_ptr.vmem [resolvable:$true] %s1410
      %1413 = dma.vmem_to_hbm [thread:$0]  %s1411, 64, %s5, [#allocation4]
    $region37: #{tpu_custom_call.1} parent=1 // pred_fallthru
      _
    // Predicated region
    $region38: #{tpu_custom_call.1} parent=1 // pred_check
      _
    $region39: #{tpu_custom_call.1} parent=1 // pred_check_branch
      %1415 = sbr.rel (0) target = $region41
    $region40: #{tpu_custom_call.1} parent=1 // pred_region
      %1416 = dma.done [#allocation4], 64
    $region41: #{tpu_custom_call.1} parent=1 // pred_fallthru
      _
    %1417 = vsyncpa [#allocation3], 1
    %1418 = vsyncpa [#allocation6], 1
    %1419 = vsyncpa [#allocation4], 1

</llo_original>
